<compile_context>
chip_gen: v7x
topology: tpu7x:2x2x1
jax: 0.10.0
libtpu: 0.0.40
codegen_flags: <defaults>
</compile_context>

<pallas_src>
import functools

import jax
import jax.numpy as jnp
from jax.experimental import pallas as pl
from jax.experimental.pallas import tpu as pltpu

NEG_BIG = -10000000000.0


def _round_up(x, m):
    return (x + m - 1) // m * m


def hier_embed_kernel(ids_ref, table_ref, v1_ref, out_ref, *, chunk, unroll):
    # ids_ref  : (TN, K+1) int32   col 0 = token id, cols 1..K = ancestors
    # table_ref: (V, E+2)  float32 [embed | embed@v2 + c | row-sum] (resident)
    # v1_ref   : (1, E)    float32 (Wa[:, :E])^T @ ua
    # out_ref  : (TN, E)   float32 attention-weighted hierarchy embedding
    V = table_ref.shape[0]
    E = v1_ref.shape[-1]
    K = ids_ref.shape[-1] - 1
    TN = ids_ref.shape[0]
    num_chunks = TN // chunk

    table = table_ref[...]                                        # (V, E+2)
    v1 = v1_ref[...]                                              # (1, E)
    # Hoisted: JAX does not CSE broadcast/iota, so build it once per tile.
    iota_v = jax.lax.broadcasted_iota(jnp.int32, (chunk, V), 1)   # (C, V)

    def gather(ids_col):
        # one-hot(id) @ table on the otherwise-idle MXU (exact row pick).
        onehot = (ids_col == iota_v).astype(jnp.float32)          # (C, V)
        return jnp.dot(onehot, table, preferred_element_type=jnp.float32)

    def body(ci, carry):
        start = pl.multiple_of(ci * chunk, chunk)
        ids = ids_ref[pl.ds(start, chunk), :]                     # (C, K+1)

        ev1 = gather(ids[:, 0:1])[:, :E] * v1                     # eis * v1

        # Online softmax over the K hierarchy levels.
        m = jnp.full((chunk, 1), NEG_BIG, jnp.float32)
        l = jnp.zeros((chunk, 1), jnp.float32)
        acc = jnp.zeros((chunk, E), jnp.float32)
        for k in range(1, K + 1):                                 # static, K=6
            emb = gather(ids[:, k:k + 1])                         # (C, E+2)
            ejs_k = emb[:, :E]
            s2c = emb[:, E:E + 1]        # sum_e(ejs_k * v2) + c  (from table)
            rsum = emb[:, E + 1:E + 2]   # sum_e(ejs_k)           (alpha mask)
            # xs_mask: zero eis where ejs == 0 (masking commutes with *v1).
            s1 = jnp.sum(jnp.where(ejs_k == 0.0, 0.0, ev1),
                         axis=-1, keepdims=True)                  # (C, 1)
            s = jnp.where(rsum == 0.0, NEG_BIG, s1 + s2c)         # (C, 1)
            m_new = jnp.maximum(m, s)
            a = jnp.exp(m - m_new)
            p = jnp.exp(s - m_new)
            l = a * l + p
            acc = a * acc + p * ejs_k
            m = m_new

        inv = pl.reciprocal(l, approx=True)
        inv = inv * (2.0 - l * inv)      # one Newton step -> full precision
        out_ref[pl.ds(start, chunk), :] = (acc * inv).astype(out_ref.dtype)
        return carry

    jax.lax.fori_loop(0, num_chunks, body, 0, unroll=unroll)


def embedding_layer_forward(xs, embed_weight, path_map, wa_weight, wa_bias, ua,
                            *, tile_tokens=1024):
    """xs: (B, S) int32. Returns gis: (B, S, E) float32."""
    B, S = xs.shape
    V, E = embed_weight.shape
    K = path_map.shape[1]
    r = wa_weight.shape[0]

    # --- fold ua into Wa (exact: no nonlinearity between Wa and ua) ---
    ua_vec = ua.reshape(r).astype(jnp.float32)
    v = jnp.dot(wa_weight.T, ua_vec,
                precision=jax.lax.Precision.HIGHEST)              # (2E,)
    v1 = v[:E].reshape(1, E)
    v2 = v[E:]
    c = jnp.dot(wa_bias, ua_vec, precision=jax.lax.Precision.HIGHEST)

    # --- augmented, VMEM-resident table: [embed | embed@v2 + c | row-sum] ---
    tw = embed_weight.astype(jnp.float32)
    tv2c = (jnp.dot(tw, v2, precision=jax.lax.Precision.HIGHEST)
            + c).reshape(V, 1)
    rowsum = jnp.sum(tw, axis=1, keepdims=True)
    table_aug = jnp.concatenate([tw, tv2c, rowsum], axis=1)       # (V, E+2)

    # --- tiny per-token id slab: token id + its K hierarchy ancestors ---
    N = B * S
    xs_flat = xs.reshape(N).astype(jnp.int32)
    ids = jnp.concatenate(
        [xs_flat[:, None], path_map[xs_flat].astype(jnp.int32)],
        axis=1)                                                   # (N, K+1)

    # Tile size: big tiles amortize grid overhead, but keep >= 2 tiles so the
    # single "parallel" axis gives both v7x TensorCores work.
    TN = min(int(tile_tokens), _round_up((N + 1) // 2, 8))
    TN = max(8, _round_up(TN, 8))
    N_pad = _round_up(N, TN)
    if N_pad != N:
        # Zero-padded ids hit the pad row (all-zero embedding) -> all levels
        # masked -> gis = 0, no NaNs; padded rows are sliced off below.
        ids = jnp.pad(ids, ((0, N_pad - N), (0, 0)))

    chunk = min(64, TN)
    while TN % chunk:
        chunk -= 8
    num_chunks = TN // chunk
    if num_chunks <= 4:
        unroll = True
    elif num_chunks % 4 == 0:
        unroll = 4
    elif num_chunks % 2 == 0:
        unroll = 2
    else:
        unroll = 1

    out = pl.pallas_call(
        functools.partial(hier_embed_kernel, chunk=chunk, unroll=unroll),
        out_shape=jax.ShapeDtypeStruct((N_pad, E), jnp.float32),
        grid_spec=pltpu.PrefetchScalarGridSpec(
            num_scalar_prefetch=0,
            grid=(N_pad // TN,),
            in_specs=[
                pl.BlockSpec((TN, K + 1), lambda i: (i, 0)),   # ids (tiled)
                pl.BlockSpec((V, E + 2), lambda i: (0, 0)),    # table (resident)
                pl.BlockSpec((1, E), lambda i: (0, 0)),        # v1 (resident)
            ],
            out_specs=pl.BlockSpec((TN, E), lambda i: (i, 0)),
        ),
        compiler_params=pltpu.CompilerParams(
            dimension_semantics=("parallel",)),
    )(ids, table_aug, v1)

    return out[:N].reshape(B, S, E)


def reference_forward(xs, embed_weight, path_map, wa_weight, wa_bias, ua):
    """Pure-JAX mirror of the PyTorch forward for verification."""
    eis = embed_weight[xs]                               # (B, S, E)
    ejs = embed_weight[path_map[xs]]                     # (B, S, K, E)
    eis_ = jnp.broadcast_to(eis[:, :, None, :], ejs.shape)
    xs_mask = ejs == 0
    alpha_mask = ejs.sum(-1) == 0
    eis_ = jnp.where(xs_mask, 0.0, eis_)
    cat = jnp.concatenate([eis_, ejs], axis=-1)          # (B, S, K, 2E)
    h = cat @ wa_weight.T + wa_bias                      # (B, S, K, r)
    score = (ua.reshape(1, 1, 1, -1) * h).sum(-1)        # (B, S, K)
    score = jnp.where(alpha_mask, NEG_BIG, score)
    alpha = jax.nn.softmax(score, axis=-1)
    gis = (alpha[..., None] * ejs).sum(-2)               # (B, S, E)
    return gis


if __name__ == "__main__":
    # Small, deterministic configuration.
    vocab_size = 64
    embed_size = 32          # E
    r = 64
    len_level = 5            # -> K = len_level + 1 = 6 hierarchy levels
    K = len_level + 1
    pad_idx = 0
    B, S = 2, 8

    key = jax.random.PRNGKey(0)
    k_emb, k_w, k_b, k_ua, k_pm, k_xs, k_xs2 = jax.random.split(key, 7)

    # Parameters (deterministic, synthetic; mirrors __init__ shapes).
    embed_weight = jax.random.normal(k_emb, (vocab_size, embed_size),
                                     dtype=jnp.float32) * 0.001
    embed_weight = embed_weight.at[pad_idx, :].set(0.0)

    wa_weight = jax.random.normal(k_w, (r, 2 * embed_size),
                                  dtype=jnp.float32) * 0.1
    wa_bias = jax.random.normal(k_b, (r,), dtype=jnp.float32) * 0.1
    ua = jax.random.normal(k_ua, (1, 1, 1, r), dtype=jnp.float32)

    # path_map: each vocab id -> its K ancestor ids in the hierarchy.
    path_map = jax.random.randint(k_pm, (vocab_size, K), 0, vocab_size,
                                  dtype=jnp.int32)
    path_map = path_map.at[pad_idx, :].set(0)          # pad token -> pad path
    path_map = path_map.at[:, K - 1].set(
        jnp.where(jnp.arange(vocab_size) % 3 == 0, 0, path_map[:, K - 1]))

    # --- test 1: module-sized input (B=2, S=8), 2-tile grid ---
    xs = jax.random.randint(k_xs, (B, S), 0, vocab_size, dtype=jnp.int32)
    out = jax.block_until_ready(
        embedding_layer_forward(xs, embed_weight, path_map,
                                wa_weight, wa_bias, ua))
    ref = jax.block_until_ready(
        reference_forward(xs, embed_weight, path_map, wa_weight, wa_bias, ua))
    assert out.shape == (B, S, embed_size)
    err = jnp.max(jnp.abs(out - ref))
    assert jnp.allclose(out, ref, atol=1e-5, rtol=1e-4), f"max abs diff {err}"

    # --- test 2: multi-tile grid + row padding (N=150, TN=64 -> grid of 3) ---
    xs2 = jax.random.randint(k_xs2, (3, 50), 0, vocab_size, dtype=jnp.int32)
    out2 = jax.block_until_ready(
        embedding_layer_forward(xs2, embed_weight, path_map,
                                wa_weight, wa_bias, ua, tile_tokens=64))
    ref2 = jax.block_until_ready(
        reference_forward(xs2, embed_weight, path_map, wa_weight, wa_bias, ua))
    err2 = jnp.max(jnp.abs(out2 - ref2))
    assert jnp.allclose(out2, ref2, atol=1e-5, rtol=1e-4), f"max abs diff {err2}"

    print("KERNEL_OK")
</pallas_src>

<mosaic_0001>
module attributes {stable_mosaic.version = 11 : i64} {
  func.func @hier_embed_kernel(%arg0: i32, %arg1: memref<8x7xi32, #tpu.memory_space<vmem>>, %arg2: memref<64x34xf32, #tpu.memory_space<vmem>>, %arg3: memref<1x32xf32, #tpu.memory_space<vmem>>, %arg4: memref<8x32xf32, #tpu.memory_space<vmem>>) attributes {dimension_semantics = [#tpu.dimension_semantics<parallel>], iteration_bounds = array<i64: 2>, scalar_prefetch = 0 : i64, scratch_operands = 0 : i64, tpu.core_type = #tpu.core_type<tc>, window_params = [{transform_indices = @transform_0, window_bounds = array<i64: 8, 7>}, {pipeline_mode = #tpu.pipeline_mode<synchronous>, transform_indices = @transform_1, window_bounds = array<i64: 64, 34>}, {pipeline_mode = #tpu.pipeline_mode<synchronous>, transform_indices = @transform_2, window_bounds = array<i64: 1, 32>}, {transform_indices = @transform_3, window_bounds = array<i64: 8, 32>}]} {
    %c0 = arith.constant 0 : index
    %c0_0 = arith.constant 0 : index
    %0 = vector.load %arg2[%c0, %c0_0] : memref<64x34xf32, #tpu.memory_space<vmem>>, vector<64x34xf32>
    %c0_1 = arith.constant 0 : index
    %c0_2 = arith.constant 0 : index
    %1 = vector.load %arg3[%c0_1, %c0_2] : memref<1x32xf32, #tpu.memory_space<vmem>>, vector<1x32xf32>
    %2 = tpu.iota {dimensions = array<i32: 1>} : vector<8x64xi32>
    %c0_i32 = arith.constant 0 : i32
    %c8_i32 = arith.constant 8 : i32
    %3 = arith.muli %c0_i32, %c8_i32 : i32
    %4 = tpu.assume_multiple %3, 8 : i32
    %5 = arith.index_cast %4 : i32 to index
    %c0_3 = arith.constant 0 : index
    %6 = vector.load %arg1[%5, %c0_3] : memref<8x7xi32, #tpu.memory_space<vmem>>, vector<8x7xi32>
    %7 = vector.extract_strided_slice %6 {offsets = [0, 0], sizes = [8, 1], strides = [1, 1]} : vector<8x7xi32> to vector<8x1xi32>
    %8 = vector.broadcast %7 : vector<8x1xi32> to vector<8x64xi32>
    %9 = arith.cmpi eq, %8, %2 : vector<8x64xi32>
    %10 = arith.extui %9 : vector<8x64xi1> to vector<8x64xi32>
    %11 = arith.sitofp %10 : vector<8x64xi32> to vector<8x64xf32>
    %cst = arith.constant dense<0.000000e+00> : vector<8x34xf32>
    %12 = tpu.matmul %11, %0, %cst {dimension_numbers = #tpu.dot_dimension_numbers<[1], [0], [0], [1], [0, 0, 1, 1], [], []>} : vector<8x64xf32>, vector<64x34xf32>, vector<8x34xf32> -> vector<8x34xf32>
    %13 = vector.extract_strided_slice %12 {offsets = [0, 0], sizes = [8, 32], strides = [1, 1]} : vector<8x34xf32> to vector<8x32xf32>
    %14 = vector.broadcast %1 : vector<1x32xf32> to vector<8x32xf32>
    %15 = arith.mulf %13, %14 : vector<8x32xf32>
    %cst_4 = arith.constant -1.000000e+10 : f32
    %16 = vector.broadcast %cst_4 : f32 to vector<8x1xf32>
    %cst_5 = arith.constant 0.000000e+00 : f32
    %17 = vector.broadcast %cst_5 : f32 to vector<8x1xf32>
    %cst_6 = arith.constant 0.000000e+00 : f32
    %18 = vector.broadcast %cst_6 : f32 to vector<8x32xf32>
    %19 = vector.extract_strided_slice %6 {offsets = [0, 1], sizes = [8, 1], strides = [1, 1]} : vector<8x7xi32> to vector<8x1xi32>
    %20 = vector.broadcast %19 : vector<8x1xi32> to vector<8x64xi32>
    %21 = arith.cmpi eq, %20, %2 : vector<8x64xi32>
    %22 = arith.extui %21 : vector<8x64xi1> to vector<8x64xi32>
    %23 = arith.sitofp %22 : vector<8x64xi32> to vector<8x64xf32>
    %cst_7 = arith.constant dense<0.000000e+00> : vector<8x34xf32>
    %24 = tpu.matmul %23, %0, %cst_7 {dimension_numbers = #tpu.dot_dimension_numbers<[1], [0], [0], [1], [0, 0, 1, 1], [], []>} : vector<8x64xf32>, vector<64x34xf32>, vector<8x34xf32> -> vector<8x34xf32>
    %25 = vector.extract_strided_slice %24 {offsets = [0, 0], sizes = [8, 32], strides = [1, 1]} : vector<8x34xf32> to vector<8x32xf32>
    %26 = vector.extract_strided_slice %24 {offsets = [0, 32], sizes = [8, 1], strides = [1, 1]} : vector<8x34xf32> to vector<8x1xf32>
    %27 = vector.extract_strided_slice %24 {offsets = [0, 33], sizes = [8, 1], strides = [1, 1]} : vector<8x34xf32> to vector<8x1xf32>
    %cst_8 = arith.constant 0.000000e+00 : f32
    %28 = vector.broadcast %cst_8 : f32 to vector<8x32xf32>
    %29 = arith.cmpf oeq, %25, %28 : vector<8x32xf32>
    %cst_9 = arith.constant 0.000000e+00 : f32
    %30 = vector.broadcast %cst_9 : f32 to vector<8x32xf32>
    %31 = arith.select %29, %30, %15 : vector<8x32xi1>, vector<8x32xf32>
    %cst_10 = arith.constant dense<0.000000e+00> : vector<8xf32>
    %32 = vector.multi_reduction <add>, %31, %cst_10 [1] : vector<8x32xf32> to vector<8xf32>
    %33 = vector.shape_cast %32 : vector<8xf32> to vector<8x1xf32>
    %cst_11 = arith.constant 0.000000e+00 : f32
    %34 = vector.broadcast %cst_11 : f32 to vector<8x1xf32>
    %35 = arith.cmpf oeq, %27, %34 : vector<8x1xf32>
    %36 = arith.addf %33, %26 : vector<8x1xf32>
    %cst_12 = arith.constant -1.000000e+10 : f32
    %37 = vector.broadcast %cst_12 : f32 to vector<8x1xf32>
    %38 = arith.select %35, %37, %36 : vector<8x1xi1>, vector<8x1xf32>
    %39 = arith.maximumf %16, %38 : vector<8x1xf32>
    %40 = arith.subf %16, %39 : vector<8x1xf32>
    %41 = math.exp %40 : vector<8x1xf32>
    %42 = arith.subf %38, %39 : vector<8x1xf32>
    %43 = math.exp %42 : vector<8x1xf32>
    %44 = arith.mulf %41, %17 : vector<8x1xf32>
    %45 = arith.addf %44, %43 : vector<8x1xf32>
    %46 = vector.broadcast %41 : vector<8x1xf32> to vector<8x32xf32>
    %47 = arith.mulf %46, %18 : vector<8x32xf32>
    %48 = vector.broadcast %43 : vector<8x1xf32> to vector<8x32xf32>
    %49 = arith.mulf %48, %25 : vector<8x32xf32>
    %50 = arith.addf %47, %49 : vector<8x32xf32>
    %51 = vector.extract_strided_slice %6 {offsets = [0, 2], sizes = [8, 1], strides = [1, 1]} : vector<8x7xi32> to vector<8x1xi32>
    %52 = vector.broadcast %51 : vector<8x1xi32> to vector<8x64xi32>
    %53 = arith.cmpi eq, %52, %2 : vector<8x64xi32>
    %54 = arith.extui %53 : vector<8x64xi1> to vector<8x64xi32>
    %55 = arith.sitofp %54 : vector<8x64xi32> to vector<8x64xf32>
    %cst_13 = arith.constant dense<0.000000e+00> : vector<8x34xf32>
    %56 = tpu.matmul %55, %0, %cst_13 {dimension_numbers = #tpu.dot_dimension_numbers<[1], [0], [0], [1], [0, 0, 1, 1], [], []>} : vector<8x64xf32>, vector<64x34xf32>, vector<8x34xf32> -> vector<8x34xf32>
    %57 = vector.extract_strided_slice %56 {offsets = [0, 0], sizes = [8, 32], strides = [1, 1]} : vector<8x34xf32> to vector<8x32xf32>
    %58 = vector.extract_strided_slice %56 {offsets = [0, 32], sizes = [8, 1], strides = [1, 1]} : vector<8x34xf32> to vector<8x1xf32>
    %59 = vector.extract_strided_slice %56 {offsets = [0, 33], sizes = [8, 1], strides = [1, 1]} : vector<8x34xf32> to vector<8x1xf32>
    %cst_14 = arith.constant 0.000000e+00 : f32
    %60 = vector.broadcast %cst_14 : f32 to vector<8x32xf32>
    %61 = arith.cmpf oeq, %57, %60 : vector<8x32xf32>
    %cst_15 = arith.constant 0.000000e+00 : f32
    %62 = vector.broadcast %cst_15 : f32 to vector<8x32xf32>
    %63 = arith.select %61, %62, %15 : vector<8x32xi1>, vector<8x32xf32>
    %cst_16 = arith.constant dense<0.000000e+00> : vector<8xf32>
    %64 = vector.multi_reduction <add>, %63, %cst_16 [1] : vector<8x32xf32> to vector<8xf32>
    %65 = vector.shape_cast %64 : vector<8xf32> to vector<8x1xf32>
    %cst_17 = arith.constant 0.000000e+00 : f32
    %66 = vector.broadcast %cst_17 : f32 to vector<8x1xf32>
    %67 = arith.cmpf oeq, %59, %66 : vector<8x1xf32>
    %68 = arith.addf %65, %58 : vector<8x1xf32>
    %cst_18 = arith.constant -1.000000e+10 : f32
    %69 = vector.broadcast %cst_18 : f32 to vector<8x1xf32>
    %70 = arith.select %67, %69, %68 : vector<8x1xi1>, vector<8x1xf32>
    %71 = arith.maximumf %39, %70 : vector<8x1xf32>
    %72 = arith.subf %39, %71 : vector<8x1xf32>
    %73 = math.exp %72 : vector<8x1xf32>
    %74 = arith.subf %70, %71 : vector<8x1xf32>
    %75 = math.exp %74 : vector<8x1xf32>
    %76 = arith.mulf %73, %45 : vector<8x1xf32>
    %77 = arith.addf %76, %75 : vector<8x1xf32>
    %78 = vector.broadcast %73 : vector<8x1xf32> to vector<8x32xf32>
    %79 = arith.mulf %78, %50 : vector<8x32xf32>
    %80 = vector.broadcast %75 : vector<8x1xf32> to vector<8x32xf32>
    %81 = arith.mulf %80, %57 : vector<8x32xf32>
    %82 = arith.addf %79, %81 : vector<8x32xf32>
    %83 = vector.extract_strided_slice %6 {offsets = [0, 3], sizes = [8, 1], strides = [1, 1]} : vector<8x7xi32> to vector<8x1xi32>
    %84 = vector.broadcast %83 : vector<8x1xi32> to vector<8x64xi32>
    %85 = arith.cmpi eq, %84, %2 : vector<8x64xi32>
    %86 = arith.extui %85 : vector<8x64xi1> to vector<8x64xi32>
    %87 = arith.sitofp %86 : vector<8x64xi32> to vector<8x64xf32>
    %cst_19 = arith.constant dense<0.000000e+00> : vector<8x34xf32>
    %88 = tpu.matmul %87, %0, %cst_19 {dimension_numbers = #tpu.dot_dimension_numbers<[1], [0], [0], [1], [0, 0, 1, 1], [], []>} : vector<8x64xf32>, vector<64x34xf32>, vector<8x34xf32> -> vector<8x34xf32>
    %89 = vector.extract_strided_slice %88 {offsets = [0, 0], sizes = [8, 32], strides = [1, 1]} : vector<8x34xf32> to vector<8x32xf32>
    %90 = vector.extract_strided_slice %88 {offsets = [0, 32], sizes = [8, 1], strides = [1, 1]} : vector<8x34xf32> to vector<8x1xf32>
    %91 = vector.extract_strided_slice %88 {offsets = [0, 33], sizes = [8, 1], strides = [1, 1]} : vector<8x34xf32> to vector<8x1xf32>
    %cst_20 = arith.constant 0.000000e+00 : f32
    %92 = vector.broadcast %cst_20 : f32 to vector<8x32xf32>
    %93 = arith.cmpf oeq, %89, %92 : vector<8x32xf32>
    %cst_21 = arith.constant 0.000000e+00 : f32
    %94 = vector.broadcast %cst_21 : f32 to vector<8x32xf32>
    %95 = arith.select %93, %94, %15 : vector<8x32xi1>, vector<8x32xf32>
    %cst_22 = arith.constant dense<0.000000e+00> : vector<8xf32>
    %96 = vector.multi_reduction <add>, %95, %cst_22 [1] : vector<8x32xf32> to vector<8xf32>
    %97 = vector.shape_cast %96 : vector<8xf32> to vector<8x1xf32>
    %cst_23 = arith.constant 0.000000e+00 : f32
    %98 = vector.broadcast %cst_23 : f32 to vector<8x1xf32>
    %99 = arith.cmpf oeq, %91, %98 : vector<8x1xf32>
    %100 = arith.addf %97, %90 : vector<8x1xf32>
    %cst_24 = arith.constant -1.000000e+10 : f32
    %101 = vector.broadcast %cst_24 : f32 to vector<8x1xf32>
    %102 = arith.select %99, %101, %100 : vector<8x1xi1>, vector<8x1xf32>
    %103 = arith.maximumf %71, %102 : vector<8x1xf32>
    %104 = arith.subf %71, %103 : vector<8x1xf32>
    %105 = math.exp %104 : vector<8x1xf32>
    %106 = arith.subf %102, %103 : vector<8x1xf32>
    %107 = math.exp %106 : vector<8x1xf32>
    %108 = arith.mulf %105, %77 : vector<8x1xf32>
    %109 = arith.addf %108, %107 : vector<8x1xf32>
    %110 = vector.broadcast %105 : vector<8x1xf32> to vector<8x32xf32>
    %111 = arith.mulf %110, %82 : vector<8x32xf32>
    %112 = vector.broadcast %107 : vector<8x1xf32> to vector<8x32xf32>
    %113 = arith.mulf %112, %89 : vector<8x32xf32>
    %114 = arith.addf %111, %113 : vector<8x32xf32>
    %115 = vector.extract_strided_slice %6 {offsets = [0, 4], sizes = [8, 1], strides = [1, 1]} : vector<8x7xi32> to vector<8x1xi32>
    %116 = vector.broadcast %115 : vector<8x1xi32> to vector<8x64xi32>
    %117 = arith.cmpi eq, %116, %2 : vector<8x64xi32>
    %118 = arith.extui %117 : vector<8x64xi1> to vector<8x64xi32>
    %119 = arith.sitofp %118 : vector<8x64xi32> to vector<8x64xf32>
    %cst_25 = arith.constant dense<0.000000e+00> : vector<8x34xf32>
    %120 = tpu.matmul %119, %0, %cst_25 {dimension_numbers = #tpu.dot_dimension_numbers<[1], [0], [0], [1], [0, 0, 1, 1], [], []>} : vector<8x64xf32>, vector<64x34xf32>, vector<8x34xf32> -> vector<8x34xf32>
    %121 = vector.extract_strided_slice %120 {offsets = [0, 0], sizes = [8, 32], strides = [1, 1]} : vector<8x34xf32> to vector<8x32xf32>
    %122 = vector.extract_strided_slice %120 {offsets = [0, 32], sizes = [8, 1], strides = [1, 1]} : vector<8x34xf32> to vector<8x1xf32>
    %123 = vector.extract_strided_slice %120 {offsets = [0, 33], sizes = [8, 1], strides = [1, 1]} : vector<8x34xf32> to vector<8x1xf32>
    %cst_26 = arith.constant 0.000000e+00 : f32
    %124 = vector.broadcast %cst_26 : f32 to vector<8x32xf32>
    %125 = arith.cmpf oeq, %121, %124 : vector<8x32xf32>
    %cst_27 = arith.constant 0.000000e+00 : f32
    %126 = vector.broadcast %cst_27 : f32 to vector<8x32xf32>
    %127 = arith.select %125, %126, %15 : vector<8x32xi1>, vector<8x32xf32>
    %cst_28 = arith.constant dense<0.000000e+00> : vector<8xf32>
    %128 = vector.multi_reduction <add>, %127, %cst_28 [1] : vector<8x32xf32> to vector<8xf32>
    %129 = vector.shape_cast %128 : vector<8xf32> to vector<8x1xf32>
    %cst_29 = arith.constant 0.000000e+00 : f32
    %130 = vector.broadcast %cst_29 : f32 to vector<8x1xf32>
    %131 = arith.cmpf oeq, %123, %130 : vector<8x1xf32>
    %132 = arith.addf %129, %122 : vector<8x1xf32>
    %cst_30 = arith.constant -1.000000e+10 : f32
    %133 = vector.broadcast %cst_30 : f32 to vector<8x1xf32>
    %134 = arith.select %131, %133, %132 : vector<8x1xi1>, vector<8x1xf32>
    %135 = arith.maximumf %103, %134 : vector<8x1xf32>
    %136 = arith.subf %103, %135 : vector<8x1xf32>
    %137 = math.exp %136 : vector<8x1xf32>
    %138 = arith.subf %134, %135 : vector<8x1xf32>
    %139 = math.exp %138 : vector<8x1xf32>
    %140 = arith.mulf %137, %109 : vector<8x1xf32>
    %141 = arith.addf %140, %139 : vector<8x1xf32>
    %142 = vector.broadcast %137 : vector<8x1xf32> to vector<8x32xf32>
    %143 = arith.mulf %142, %114 : vector<8x32xf32>
    %144 = vector.broadcast %139 : vector<8x1xf32> to vector<8x32xf32>
    %145 = arith.mulf %144, %121 : vector<8x32xf32>
    %146 = arith.addf %143, %145 : vector<8x32xf32>
    %147 = vector.extract_strided_slice %6 {offsets = [0, 5], sizes = [8, 1], strides = [1, 1]} : vector<8x7xi32> to vector<8x1xi32>
    %148 = vector.broadcast %147 : vector<8x1xi32> to vector<8x64xi32>
    %149 = arith.cmpi eq, %148, %2 : vector<8x64xi32>
    %150 = arith.extui %149 : vector<8x64xi1> to vector<8x64xi32>
    %151 = arith.sitofp %150 : vector<8x64xi32> to vector<8x64xf32>
    %cst_31 = arith.constant dense<0.000000e+00> : vector<8x34xf32>
    %152 = tpu.matmul %151, %0, %cst_31 {dimension_numbers = #tpu.dot_dimension_numbers<[1], [0], [0], [1], [0, 0, 1, 1], [], []>} : vector<8x64xf32>, vector<64x34xf32>, vector<8x34xf32> -> vector<8x34xf32>
    %153 = vector.extract_strided_slice %152 {offsets = [0, 0], sizes = [8, 32], strides = [1, 1]} : vector<8x34xf32> to vector<8x32xf32>
    %154 = vector.extract_strided_slice %152 {offsets = [0, 32], sizes = [8, 1], strides = [1, 1]} : vector<8x34xf32> to vector<8x1xf32>
    %155 = vector.extract_strided_slice %152 {offsets = [0, 33], sizes = [8, 1], strides = [1, 1]} : vector<8x34xf32> to vector<8x1xf32>
    %cst_32 = arith.constant 0.000000e+00 : f32
    %156 = vector.broadcast %cst_32 : f32 to vector<8x32xf32>
    %157 = arith.cmpf oeq, %153, %156 : vector<8x32xf32>
    %cst_33 = arith.constant 0.000000e+00 : f32
    %158 = vector.broadcast %cst_33 : f32 to vector<8x32xf32>
    %159 = arith.select %157, %158, %15 : vector<8x32xi1>, vector<8x32xf32>
    %cst_34 = arith.constant dense<0.000000e+00> : vector<8xf32>
    %160 = vector.multi_reduction <add>, %159, %cst_34 [1] : vector<8x32xf32> to vector<8xf32>
    %161 = vector.shape_cast %160 : vector<8xf32> to vector<8x1xf32>
    %cst_35 = arith.constant 0.000000e+00 : f32
    %162 = vector.broadcast %cst_35 : f32 to vector<8x1xf32>
    %163 = arith.cmpf oeq, %155, %162 : vector<8x1xf32>
    %164 = arith.addf %161, %154 : vector<8x1xf32>
    %cst_36 = arith.constant -1.000000e+10 : f32
    %165 = vector.broadcast %cst_36 : f32 to vector<8x1xf32>
    %166 = arith.select %163, %165, %164 : vector<8x1xi1>, vector<8x1xf32>
    %167 = arith.maximumf %135, %166 : vector<8x1xf32>
    %168 = arith.subf %135, %167 : vector<8x1xf32>
    %169 = math.exp %168 : vector<8x1xf32>
    %170 = arith.subf %166, %167 : vector<8x1xf32>
    %171 = math.exp %170 : vector<8x1xf32>
    %172 = arith.mulf %169, %141 : vector<8x1xf32>
    %173 = arith.addf %172, %171 : vector<8x1xf32>
    %174 = vector.broadcast %169 : vector<8x1xf32> to vector<8x32xf32>
    %175 = arith.mulf %174, %146 : vector<8x32xf32>
    %176 = vector.broadcast %171 : vector<8x1xf32> to vector<8x32xf32>
    %177 = arith.mulf %176, %153 : vector<8x32xf32>
    %178 = arith.addf %175, %177 : vector<8x32xf32>
    %179 = vector.extract_strided_slice %6 {offsets = [0, 6], sizes = [8, 1], strides = [1, 1]} : vector<8x7xi32> to vector<8x1xi32>
    %180 = vector.broadcast %179 : vector<8x1xi32> to vector<8x64xi32>
    %181 = arith.cmpi eq, %180, %2 : vector<8x64xi32>
    %182 = arith.extui %181 : vector<8x64xi1> to vector<8x64xi32>
    %183 = arith.sitofp %182 : vector<8x64xi32> to vector<8x64xf32>
    %cst_37 = arith.constant dense<0.000000e+00> : vector<8x34xf32>
    %184 = tpu.matmul %183, %0, %cst_37 {dimension_numbers = #tpu.dot_dimension_numbers<[1], [0], [0], [1], [0, 0, 1, 1], [], []>} : vector<8x64xf32>, vector<64x34xf32>, vector<8x34xf32> -> vector<8x34xf32>
    %185 = vector.extract_strided_slice %184 {offsets = [0, 0], sizes = [8, 32], strides = [1, 1]} : vector<8x34xf32> to vector<8x32xf32>
    %186 = vector.extract_strided_slice %184 {offsets = [0, 32], sizes = [8, 1], strides = [1, 1]} : vector<8x34xf32> to vector<8x1xf32>
    %187 = vector.extract_strided_slice %184 {offsets = [0, 33], sizes = [8, 1], strides = [1, 1]} : vector<8x34xf32> to vector<8x1xf32>
    %cst_38 = arith.constant 0.000000e+00 : f32
    %188 = vector.broadcast %cst_38 : f32 to vector<8x32xf32>
    %189 = arith.cmpf oeq, %185, %188 : vector<8x32xf32>
    %cst_39 = arith.constant 0.000000e+00 : f32
    %190 = vector.broadcast %cst_39 : f32 to vector<8x32xf32>
    %191 = arith.select %189, %190, %15 : vector<8x32xi1>, vector<8x32xf32>
    %cst_40 = arith.constant dense<0.000000e+00> : vector<8xf32>
    %192 = vector.multi_reduction <add>, %191, %cst_40 [1] : vector<8x32xf32> to vector<8xf32>
    %193 = vector.shape_cast %192 : vector<8xf32> to vector<8x1xf32>
    %cst_41 = arith.constant 0.000000e+00 : f32
    %194 = vector.broadcast %cst_41 : f32 to vector<8x1xf32>
    %195 = arith.cmpf oeq, %187, %194 : vector<8x1xf32>
    %196 = arith.addf %193, %186 : vector<8x1xf32>
    %cst_42 = arith.constant -1.000000e+10 : f32
    %197 = vector.broadcast %cst_42 : f32 to vector<8x1xf32>
    %198 = arith.select %195, %197, %196 : vector<8x1xi1>, vector<8x1xf32>
    %199 = arith.maximumf %167, %198 : vector<8x1xf32>
    %200 = arith.subf %167, %199 : vector<8x1xf32>
    %201 = math.exp %200 : vector<8x1xf32>
    %202 = arith.subf %198, %199 : vector<8x1xf32>
    %203 = math.exp %202 : vector<8x1xf32>
    %204 = arith.mulf %201, %173 : vector<8x1xf32>
    %205 = arith.addf %204, %203 : vector<8x1xf32>
    %206 = vector.broadcast %201 : vector<8x1xf32> to vector<8x32xf32>
    %207 = arith.mulf %206, %178 : vector<8x32xf32>
    %208 = vector.broadcast %203 : vector<8x1xf32> to vector<8x32xf32>
    %209 = arith.mulf %208, %185 : vector<8x32xf32>
    %210 = arith.addf %207, %209 : vector<8x32xf32>
    %211 = tpu.reciprocal %205 {approx = true} : vector<8x1xf32> -> vector<8x1xf32>
    %212 = arith.mulf %205, %211 : vector<8x1xf32>
    %cst_43 = arith.constant 2.000000e+00 : f32
    %213 = vector.broadcast %cst_43 : f32 to vector<8x1xf32>
    %214 = arith.subf %213, %212 : vector<8x1xf32>
    %215 = arith.mulf %211, %214 : vector<8x1xf32>
    %216 = vector.broadcast %215 : vector<8x1xf32> to vector<8x32xf32>
    %217 = arith.mulf %210, %216 : vector<8x32xf32>
    %218 = arith.index_cast %4 : i32 to index
    %c0_44 = arith.constant 0 : index
    %219 = vector.load %arg4[%218, %c0_44] : memref<8x32xf32, #tpu.memory_space<vmem>>, vector<8x32xf32>
    tpu.vector_store %arg4[%218, %c0_44], %217 {strides = array<i32>} : memref<8x32xf32, #tpu.memory_space<vmem>>, vector<8x32xf32>,
    %c1_i32 = arith.constant 1 : i32
    return
  }
  func.func @transform_0(%arg0: i32) -> (i32, i32) {
    %c0_i32 = arith.constant 0 : i32
    %c0_i32_0 = arith.constant 0 : i32
    return %arg0, %c0_i32 : i32, i32
  }
  func.func @transform_1(%arg0: i32) -> (i32, i32) {
    %c0_i32 = arith.constant 0 : i32
    %c0_i32_0 = arith.constant 0 : i32
    %c0_i32_1 = arith.constant 0 : i32
    return %c0_i32, %c0_i32_0 : i32, i32
  }
  func.func @transform_2(%arg0: i32) -> (i32, i32) {
    %c0_i32 = arith.constant 0 : i32
    %c0_i32_0 = arith.constant 0 : i32
    %c0_i32_1 = arith.constant 0 : i32
    return %c0_i32, %c0_i32_0 : i32, i32
  }
  func.func @transform_3(%arg0: i32) -> (i32, i32) {
    %c0_i32 = arith.constant 0 : i32
    %c0_i32_0 = arith.constant 0 : i32
    return %arg0, %c0_i32 : i32, i32
  }
}

</mosaic_0001>

<llo_original>
// kernel: tpu_custom_call.1
$region0: #{tpu_custom_call.1}
  #allocation0 [shape = 'u32[]', space=smem, size = 0x4, offset = 0x4, fixed_abs, tag = 'smem constant byte address 0x4 - core index']
  #allocation1 [shape = 'u32[144,128]{1,0:T(1,128)}', space=vmem, size = 0x12000, scoped, tag = 'internal scratch']
  %s0 = inlined_call_operand.vmem [shape: s32[16,7], index: 0, kind: input, shape index: {}]
  %s1 = inlined_call_operand.vmem [shape: f32[64,34], index: 1, kind: input, shape index: {}]
  %s2 = inlined_call_operand.vmem [shape: f32[1,32], index: 2, kind: input, shape index: {}]
  %s3 = inlined_call_operand.hbm [shape: f32[16,32], index: 3, kind: output, shape index: {}]
  %s4 = sld [smem:[#allocation0]]
  $region45: #{tpu_custom_call.1} parent=0
    _
  %s6 = ssub.s32 1, %s4
  %s7 = scalar_select 0, %s6, %s4
  $region1: #{tpu_custom_call.1} parent=0
    #allocation2 [shape = 'u8[8192]{0}', space=vmem, size = 0x2000, scoped, tag = 'output window, operand 0']
    #allocation3 [shape = 's32[2]{0}', space=sflag, size = 0x8, scoped, tag = 'scoped memory for tpu_custom_call.1']
    %8 = vsyncpa [#allocation3], 0
    %s9 = scalar_lea.sflag [#allocation3], 1
    %10 = vsyncpa %s9, 0
    loop: start=0, step=1, limit=4
    $region2: #{tpu_custom_call.1} parent=1 // loop_pre_header
      _
    $region3: #{tpu_custom_call.1} parent=1 // loop_header
      %s12 = sphi 0, %s16
      %p13 = scmp.ge.s32.totalorder %s12, 4
      %s22 = sphi 0, %s24
      %s25 = sphi 0, %s22
      %s26 = sphi 0, %s25
      %s42 = sphi 0, %s26
      %s46 = sphi 0, %s46
      %s48 = sphi 0, %s46
      %s49 = sphi 0, %s48
      %s63 = sphi 0, %s49
      %s67 = sphi 0, %s67
      %s69 = sphi 0, %s67
      %s70 = sphi 0, %s69
      %s84 = sphi 0, %s70
      %s90 = sphi 0, %s92
      %s93 = sphi 0, %s90
      %s94 = sphi 0, %s93
      %s110 = sphi 0, %s94
    $region4: #{tpu_custom_call.1} parent=1 // loop_header_branch
      %15 = sbr.rel (%p13) target = $region8
    $region5: #{tpu_custom_call.1} parent=1 // loop_body
      %s17 = ssub.s32 %s12, 1
      %s18 = ssub.s32 %s12, 2
      %s19 = sadd.s32 %s12, 1
      %s20 = ssub.s32 %s12, %s19
      %p21 = scmp.eq.s32.totalorder %s20, 0
      %s23 = sadd.s32 %s22, 1
      %s24 = scalar_select %p21, %s22, %s23
      %p27 = pneg %p21
      %p28 = scmp.eq.s32.totalorder %s12, 1
      %p29 = por %p27, %p28
      %p30 = scmp.ne.s32.totalorder %s22, %s25
      %p31 = scmp.eq.s32.totalorder %s12, 0
      %p32 = por %p30, %p31
      %p33 = scmp.ne.s32.totalorder %s22, %s25
      %p34 = scmp.eq.s32.totalorder %s17, 1
      %p35 = por %p33, %p34
      %p36 = scmp.ne.s32.totalorder %s25, %s26
      %p37 = scmp.eq.s32.totalorder %s17, 0
      %p38 = por %p36, %p37
      %p39 = scmp.ne.s32.totalorder %s25, %s26
      %p40 = scmp.eq.s32.totalorder %s18, 1
      %p41 = por %p39, %p40
      %p43 = scmp.ne.s32.totalorder %s26, %s42
      %p44 = scmp.eq.s32.totalorder %s18, 0
      %p45 = por %p43, %p44
      %s47 = sadd.s32 %s46, 1
      %p50 = scmp.eq.s32.totalorder %s12, 1
      %p51 = scmp.ne.s32.totalorder %s46, %s48
      %p52 = scmp.eq.s32.totalorder %s12, 0
      %p53 = por %p51, %p52
      %p54 = scmp.ne.s32.totalorder %s46, %s48
      %p55 = scmp.eq.s32.totalorder %s17, 1
      %p56 = por %p54, %p55
      %p57 = scmp.ne.s32.totalorder %s48, %s49
      %p58 = scmp.eq.s32.totalorder %s17, 0
      %p59 = por %p57, %p58
      %p60 = scmp.ne.s32.totalorder %s48, %s49
      %p61 = scmp.eq.s32.totalorder %s18, 1
      %p62 = por %p60, %p61
      %p64 = scmp.ne.s32.totalorder %s49, %s63
      %p65 = scmp.eq.s32.totalorder %s18, 0
      %p66 = por %p64, %p65
      %s68 = sadd.s32 %s67, 1
      %p71 = scmp.eq.s32.totalorder %s12, 1
      %p72 = scmp.ne.s32.totalorder %s67, %s69
      %p73 = scmp.eq.s32.totalorder %s12, 0
      %p74 = por %p72, %p73
      %p75 = scmp.ne.s32.totalorder %s67, %s69
      %p76 = scmp.eq.s32.totalorder %s17, 1
      %p77 = por %p75, %p76
      %p78 = scmp.ne.s32.totalorder %s69, %s70
      %p79 = scmp.eq.s32.totalorder %s17, 0
      %p80 = por %p78, %p79
      %p81 = scmp.ne.s32.totalorder %s69, %s70
      %p82 = scmp.eq.s32.totalorder %s18, 1
      %p83 = por %p81, %p82
      %p85 = scmp.ne.s32.totalorder %s70, %s84
      %p86 = scmp.eq.s32.totalorder %s18, 0
      %p87 = por %p85, %p86
      %s88 = ssub.s32 %s12, %s19
      %p89 = scmp.eq.s32.totalorder %s88, 0
      %s91 = sadd.s32 %s90, 1
      %s92 = scalar_select %p89, %s90, %s91
      %p95 = pneg %p89
      %p96 = scmp.eq.s32.totalorder %s12, 1
      %p97 = por %p95, %p96
      %p98 = scmp.ne.s32.totalorder %s90, %s93
      %p99 = scmp.eq.s32.totalorder %s12, 0
      %p100 = por %p98, %p99
      %p101 = scmp.ne.s32.totalorder %s90, %s93
      %p102 = scmp.eq.s32.totalorder %s17, 1
      %p103 = por %p101, %p102
      %p104 = scmp.ne.s32.totalorder %s93, %s94
      %p105 = scmp.eq.s32.totalorder %s17, 0
      %p106 = por %p104, %p105
      %p107 = scmp.ne.s32.totalorder %s93, %s94
      %p108 = scmp.eq.s32.totalorder %s18, 1
      %p109 = por %p107, %p108
      %p111 = scmp.ne.s32.totalorder %s94, %s110
      %p112 = scmp.eq.s32.totalorder %s18, 0
      %p113 = por %p111, %p112
      %p114 = scmp.le.s32.totalorder 1, %s12
      %p115 = scmp.lt.s32.totalorder %s12, 3
      %p116 = pnand %p114, %p115
      %p117 = pneg %p116
      // Predicated region
      $region9: #{tpu_custom_call.1} parent=5 // pred_check
        _
      $region10: #{tpu_custom_call.1} parent=5 // pred_check_branch
        %119 = sbr.rel (%p116) target = $region12
      $region11: #{tpu_custom_call.1} parent=5 // pred_region
        %s120 = ssub.s32 %s12, 1
        // Predicated region
        $region13: #{tpu_custom_call.1} parent=11 // pred_check
          %p121 = pneg %p59
        $region14: #{tpu_custom_call.1} parent=11 // pred_check_branch
          %123 = sbr.rel (%p121) target = $region16
        $region15: #{tpu_custom_call.1} parent=11 // pred_region
          _
        $region16: #{tpu_custom_call.1} parent=11 // pred_fallthru
          _
        // Predicated region
        $region17: #{tpu_custom_call.1} parent=11 // pred_check
          %p124 = pneg %p80
        $region18: #{tpu_custom_call.1} parent=11 // pred_check_branch
          %126 = sbr.rel (%p124) target = $region20
        $region19: #{tpu_custom_call.1} parent=11 // pred_region
          _
        $region20: #{tpu_custom_call.1} parent=11 // pred_fallthru
          _
      $region12: #{tpu_custom_call.1} parent=5 // pred_fallthru
        _
      %p127 = scmp.lt.s32.totalorder %s12, 2
      // Predicated region
      $region21: #{tpu_custom_call.1} parent=5 // pred_check
        %p128 = pneg %p127
      $region22: #{tpu_custom_call.1} parent=5 // pred_check_branch
        %130 = sbr.rel (%p128) target = $region24
      $region23: #{tpu_custom_call.1} parent=5 // pred_region
        // Predicated region
        $region25: #{tpu_custom_call.1} parent=23 // pred_check
          %p131 = pneg %p32
        $region26: #{tpu_custom_call.1} parent=23 // pred_check_branch
          %133 = sbr.rel (%p131) target = $region28
        $region27: #{tpu_custom_call.1} parent=23 // pred_region
          %p134 = scmp.lt.s32.totalorder %s12, 1
          %s135 = scalar_select %p134, %s12, 1
          %s136 = smul.addr %s135, 8
          %s137 = scalar_lea.vmem %s0, %s136
        $region28: #{tpu_custom_call.1} parent=23 // pred_fallthru
          _
      $region24: #{tpu_custom_call.1} parent=5 // pred_fallthru
        _
      %p138 = scmp.le.s32.totalorder 1, %s12
      %p139 = scmp.lt.s32.totalorder %s12, 3
      %p140 = pnand %p138, %p139
      %p141 = pneg %p140
      // Predicated region
      $region29: #{tpu_custom_call.1} parent=5 // pred_check
        _
      $region30: #{tpu_custom_call.1} parent=5 // pred_check_branch
        %143 = sbr.rel (%p140) target = $region32
      $region31: #{tpu_custom_call.1} parent=5 // pred_region
        %s144 = ssub.s32 %s12, 1
        %p145 = scmp.lt.s32.totalorder %s17, 1
        %s146 = scalar_select %p145, %s17, 1
        %s147 = smul.addr %s146, 8
        %s148 = scalar_lea.vmem %s0, %s147
        %p149 = pneg %p38
        %p150 = pneg %p35
        %p151 = pneg %p59
        %p152 = pneg %p56
        %p153 = pneg %p80
        %p154 = pneg %p77
        %p155 = pneg %p106
        %p156 = pneg %p103
        %s157 = sand.u32 %s93, 1
        %s158 = scalar_lea.sflag [#allocation3], %s157
        %s159 = sand.u32 %s93, 1
        %s160 = smul.addr %s159, 8
        %s161 = scalar_lea.vmem [#allocation2], %s160
        %p162 = scmp.lt.s32.totalorder %s17, 1
        %s163 = scalar_select %p162, %s17, 1
        %s164 = smul.addr %s163, 8
        %s165 = scalar_lea.vmem %s0, %s164
        %v166 = vld [vmem:[%s1] sm:$0xff]
        %v167 = vld [vmem:[%s1 + $0x8] sm:$0xff]
        %v168 = vld [vmem:[%s1 + $0x10] sm:$0xff]
        %v169 = vld [vmem:[%s1 + $0x18] sm:$0xff]
        %v170 = vld [vmem:[%s1 + $0x20] sm:$0xff]
        %v171 = vld [vmem:[%s1 + $0x28] sm:$0xff]
        %v172 = vld [vmem:[%s1 + $0x30] sm:$0xff]
        %v173 = vld [vmem:[%s1 + $0x38] sm:$0xff]
        %v174 = vld [vmem:[%s2] sm:$0x1]
        %v175 = vlaneseq
        %v176 = vand.u32 %v175, 127
        %v177 = vld [vmem:[%s165] sm:$0xff]
        %178 = vset.pattern.permute.xlu0 0
        %179 = vperm.xlu0 %178, %v177
        %v180 = vpop.permute.xlu0 %179
        %vm181 = vcmp.eq.s32.totalorder %v180, %v176
        %v182 = vsel %vm181, 1, 0
        %v183 = vcvt.s32.f32 %v182
        %vm184 = vcmask 523264
        %v186 = vsel %vm184, %v183, 0
        %188 = vmatprep.subr.mxu0 0.0
        %189 = vmatpush1.msra.mxu0 %v166
        %190 = vmatprep.subr.mxu0 0.0
        %191 = vmatpush1.msra.mxu0 %v167
        %192 = vmatprep.subr.mxu0 0.0
        %193 = vmatpush1.msra.mxu0 %v168
        %194 = vmatprep.subr.mxu0 0.0
        %195 = vmatpush1.msra.mxu0 %v169
        %196 = vmatprep.subr.mxu0 0.0
        %197 = vmatpush1.msra.mxu0 %v170
        %198 = vmatprep.subr.mxu0 0.0
        %199 = vmatpush1.msra.mxu0 %v171
        %200 = vmatprep.subr.mxu0 0.0
        %201 = vmatpush1.msra.mxu0 %v172
        %202 = vmatprep.subr.mxu0 0.0
        %203 = vmatpush1.msra.mxu0 %v173
        %204 = vmatprep.subr.mxu0 0.0
        %205 = vmatpush1.msra.mxu0 0.0
        %206 = vmatprep.subr.mxu0 0.0
        %207 = vmatpush1.msra.mxu0 0.0
        %208 = vmatprep.subr.mxu0 0.0
        %209 = vmatpush1.msra.mxu0 0.0
        %210 = vmatprep.subr.mxu0 0.0
        %211 = vmatpush1.msra.mxu0 0.0
        %212 = vmatprep.subr.mxu0 0.0
        %213 = vmatpush1.msra.mxu0 0.0
        %214 = vmatprep.subr.mxu0 0.0
        %215 = vmatpush1.msra.mxu0 0.0
        %216 = vmatprep.subr.mxu0 0.0
        %217 = vmatpush1.msra.mxu0 0.0
        %218 = vmatprep.subr.mxu0 0.0
        %219 = vmatpush1.msra.mxu0 0.0
        %220 = vmatprep.subr.mxu0 0.0
        %221 = vmatpush1.msra.mxu0 0.0
        %222 = vmatprep.subr.mxu0 0.0
        %223 = vmatpush1.msra.mxu0 0.0
        %224 = vmatprep.subr.mxu0 0.0
        %225 = vmatpush1.msra.mxu0 0.0
        %226 = vmatprep.subr.mxu0 0.0
        %227 = vmatpush1.msra.mxu0 0.0
        %228 = vmatprep.subr.mxu0 0.0
        %229 = vmatpush1.msra.mxu0 0.0
        %230 = vmatprep.subr.mxu0 0.0
        %231 = vmatpush1.msra.mxu0 0.0
        %232 = vmatprep.subr.mxu0 0.0
        %233 = vmatpush1.msra.mxu0 0.0
        %234 = vmatprep.subr.mxu0 0.0
        %235 = vmatpush1.msra.mxu0 0.0
        %236 = vmatprep.subr.mxu0 0.0
        %237 = vmatpush1.msra.mxu0 0.0
        %238 = vmatprep.subr.mxu0 0.0
        %239 = vmatpush1.msra.mxu0 0.0
        %240 = vmatprep.subr.mxu0 0.0
        %241 = vmatpush1.msra.mxu0 0.0
        %242 = vmatprep.subr.mxu0 0.0
        %243 = vmatpush1.msra.mxu0 0.0
        %244 = vmatprep.subr.mxu0 0.0
        %245 = vmatpush1.msra.mxu0 0.0
        %246 = vmatprep.subr.mxu0 0.0
        %247 = vmatpush1.msra.mxu0 0.0
        %248 = vmatprep.subr.mxu0 0.0
        %249 = vmatpush1.msra.mxu0 0.0
        %250 = vmatprep.subr.mxu0 0.0
        %251 = vmatpush1.msra.mxu0 0.0
        %252 = vmatprep.mubr.f32.mxu0 0.0
        %253 = vmatmul.mubr.f32.gmra.mrb[0].mxu0 %v186
        %v254 = vpop.f32.mrb[0].mxu0
        %v255 = vadd.f32 0.0, %v254
        %v256 = vpop.f32.mrb[0].mxu0
        %257 = vdwg.mxu0
        %v259 = vlaneseq
        %v260 = vshrl.u32 %v259, 7
        %v261 = vsub.s32 0, %v260
        %v262 = vrot.slane %v174, %v261
        %v264 = vmul.f32 %v255, %v262
        %265 = vset.pattern.permute.xlu0 1
        %266 = vperm.xlu0 %265, %v177
        %v267 = vpop.permute.xlu0 %266
        %vm268 = vcmp.eq.s32.totalorder %v267, %v176
        %v269 = vsel %vm268, 1, 0
        %v270 = vcvt.s32.f32 %v269
        %v272 = vsel %vm184, %v270, 0
        %274 = vmatprep.subr.mxu0 0.0
        %275 = vmatpush1.msra.mxu0 %v166
        %276 = vmatprep.subr.mxu0 0.0
        %277 = vmatpush1.msra.mxu0 %v167
        %278 = vmatprep.subr.mxu0 0.0
        %279 = vmatpush1.msra.mxu0 %v168
        %280 = vmatprep.subr.mxu0 0.0
        %281 = vmatpush1.msra.mxu0 %v169
        %282 = vmatprep.subr.mxu0 0.0
        %283 = vmatpush1.msra.mxu0 %v170
        %284 = vmatprep.subr.mxu0 0.0
        %285 = vmatpush1.msra.mxu0 %v171
        %286 = vmatprep.subr.mxu0 0.0
        %287 = vmatpush1.msra.mxu0 %v172
        %288 = vmatprep.subr.mxu0 0.0
        %289 = vmatpush1.msra.mxu0 %v173
        %290 = vmatprep.subr.mxu0 0.0
        %291 = vmatpush1.msra.mxu0 0.0
        %292 = vmatprep.subr.mxu0 0.0
        %293 = vmatpush1.msra.mxu0 0.0
        %294 = vmatprep.subr.mxu0 0.0
        %295 = vmatpush1.msra.mxu0 0.0
        %296 = vmatprep.subr.mxu0 0.0
        %297 = vmatpush1.msra.mxu0 0.0
        %298 = vmatprep.subr.mxu0 0.0
        %299 = vmatpush1.msra.mxu0 0.0
        %300 = vmatprep.subr.mxu0 0.0
        %301 = vmatpush1.msra.mxu0 0.0
        %302 = vmatprep.subr.mxu0 0.0
        %303 = vmatpush1.msra.mxu0 0.0
        %304 = vmatprep.subr.mxu0 0.0
        %305 = vmatpush1.msra.mxu0 0.0
        %306 = vmatprep.subr.mxu0 0.0
        %307 = vmatpush1.msra.mxu0 0.0
        %308 = vmatprep.subr.mxu0 0.0
        %309 = vmatpush1.msra.mxu0 0.0
        %310 = vmatprep.subr.mxu0 0.0
        %311 = vmatpush1.msra.mxu0 0.0
        %312 = vmatprep.subr.mxu0 0.0
        %313 = vmatpush1.msra.mxu0 0.0
        %314 = vmatprep.subr.mxu0 0.0
        %315 = vmatpush1.msra.mxu0 0.0
        %316 = vmatprep.subr.mxu0 0.0
        %317 = vmatpush1.msra.mxu0 0.0
        %318 = vmatprep.subr.mxu0 0.0
        %319 = vmatpush1.msra.mxu0 0.0
        %320 = vmatprep.subr.mxu0 0.0
        %321 = vmatpush1.msra.mxu0 0.0
        %322 = vmatprep.subr.mxu0 0.0
        %323 = vmatpush1.msra.mxu0 0.0
        %324 = vmatprep.subr.mxu0 0.0
        %325 = vmatpush1.msra.mxu0 0.0
        %326 = vmatprep.subr.mxu0 0.0
        %327 = vmatpush1.msra.mxu0 0.0
        %328 = vmatprep.subr.mxu0 0.0
        %329 = vmatpush1.msra.mxu0 0.0
        %330 = vmatprep.subr.mxu0 0.0
        %331 = vmatpush1.msra.mxu0 0.0
        %332 = vmatprep.subr.mxu0 0.0
        %333 = vmatpush1.msra.mxu0 0.0
        %334 = vmatprep.subr.mxu0 0.0
        %335 = vmatpush1.msra.mxu0 0.0
        %336 = vmatprep.subr.mxu0 0.0
        %337 = vmatpush1.msra.mxu0 0.0
        %338 = vmatprep.mubr.f32.mxu0 0.0
        %339 = vmatmul.mubr.f32.gmra.mrb[0].mxu0 %v272
        %v340 = vpop.f32.mrb[0].mxu0
        %v341 = vadd.f32 0.0, %v340
        %v342 = vpop.f32.mrb[0].mxu0
        %343 = vdwg.mxu0
        %vm344 = vcmp.eq.f32.partialorder %v341, 0.0
        %v345 = vsel %vm344, 0.0, %v264
        %vm346 = vcmask 261120
        %v347 = vsel %vm346, %v345, 0.0
        %348 = vadd.xlane.f32.xlu0 %v347
        %v349 = vpop.xlane.xlu0 %348
        %v350 = vadd.f32 %v349, %v341
        %352 = vrot.lane.b32.xlu0 %v350, 1
        %v353 = vpop.permute.xlu0 %352
        %v355 = vsel %vm344, -1e+10, %v353
        %v356 = vmax.f32 %v355, -1e+10
        %v357 = vsub.f32 -1e+10, %v356
        %v358 = vmul.f32 %v357, 1.442695
        %v359 = vpow.pop %v358
        %v360 = vsub.f32 %v355, %v356
        %v361 = vmul.f32 %v360, 1.442695
        %v362 = vpow.pop %v361
        %v363 = vmul.f32 %v359, 0.0
        %v364 = vadd.f32 %v363, %v362
        %366 = vset.pattern.permute.xlu0 33
        %367 = vperm.xlu0 %366, %v359
        %v368 = vpop.permute.xlu0 %367
        %v370 = vmul.f32 %v368, 0.0
        %372 = vset.pattern.permute.xlu0 33
        %373 = vperm.xlu0 %372, %v362
        %v374 = vpop.permute.xlu0 %373
        %v376 = vmul.f32 %v374, %v341
        %v377 = vadd.f32 %v370, %v376
        %378 = vset.pattern.permute.xlu0 2
        %379 = vperm.xlu0 %378, %v177
        %v380 = vpop.permute.xlu0 %379
        %vm381 = vcmp.eq.s32.totalorder %v380, %v176
        %v382 = vsel %vm381, 1, 0
        %v383 = vcvt.s32.f32 %v382
        %v385 = vsel %vm184, %v383, 0
        %387 = vmatprep.subr.mxu0 0.0
        %388 = vmatpush1.msra.mxu0 %v166
        %389 = vmatprep.subr.mxu0 0.0
        %390 = vmatpush1.msra.mxu0 %v167
        %391 = vmatprep.subr.mxu0 0.0
        %392 = vmatpush1.msra.mxu0 %v168
        %393 = vmatprep.subr.mxu0 0.0
        %394 = vmatpush1.msra.mxu0 %v169
        %395 = vmatprep.subr.mxu0 0.0
        %396 = vmatpush1.msra.mxu0 %v170
        %397 = vmatprep.subr.mxu0 0.0
        %398 = vmatpush1.msra.mxu0 %v171
        %399 = vmatprep.subr.mxu0 0.0
        %400 = vmatpush1.msra.mxu0 %v172
        %401 = vmatprep.subr.mxu0 0.0
        %402 = vmatpush1.msra.mxu0 %v173
        %403 = vmatprep.subr.mxu0 0.0
        %404 = vmatpush1.msra.mxu0 0.0
        %405 = vmatprep.subr.mxu0 0.0
        %406 = vmatpush1.msra.mxu0 0.0
        %407 = vmatprep.subr.mxu0 0.0
        %408 = vmatpush1.msra.mxu0 0.0
        %409 = vmatprep.subr.mxu0 0.0
        %410 = vmatpush1.msra.mxu0 0.0
        %411 = vmatprep.subr.mxu0 0.0
        %412 = vmatpush1.msra.mxu0 0.0
        %413 = vmatprep.subr.mxu0 0.0
        %414 = vmatpush1.msra.mxu0 0.0
        %415 = vmatprep.subr.mxu0 0.0
        %416 = vmatpush1.msra.mxu0 0.0
        %417 = vmatprep.subr.mxu0 0.0
        %418 = vmatpush1.msra.mxu0 0.0
        %419 = vmatprep.subr.mxu0 0.0
        %420 = vmatpush1.msra.mxu0 0.0
        %421 = vmatprep.subr.mxu0 0.0
        %422 = vmatpush1.msra.mxu0 0.0
        %423 = vmatprep.subr.mxu0 0.0
        %424 = vmatpush1.msra.mxu0 0.0
        %425 = vmatprep.subr.mxu0 0.0
        %426 = vmatpush1.msra.mxu0 0.0
        %427 = vmatprep.subr.mxu0 0.0
        %428 = vmatpush1.msra.mxu0 0.0
        %429 = vmatprep.subr.mxu0 0.0
        %430 = vmatpush1.msra.mxu0 0.0
        %431 = vmatprep.subr.mxu0 0.0
        %432 = vmatpush1.msra.mxu0 0.0
        %433 = vmatprep.subr.mxu0 0.0
        %434 = vmatpush1.msra.mxu0 0.0
        %435 = vmatprep.subr.mxu0 0.0
        %436 = vmatpush1.msra.mxu0 0.0
        %437 = vmatprep.subr.mxu0 0.0
        %438 = vmatpush1.msra.mxu0 0.0
        %439 = vmatprep.subr.mxu0 0.0
        %440 = vmatpush1.msra.mxu0 0.0
        %441 = vmatprep.subr.mxu0 0.0
        %442 = vmatpush1.msra.mxu0 0.0
        %443 = vmatprep.subr.mxu0 0.0
        %444 = vmatpush1.msra.mxu0 0.0
        %445 = vmatprep.subr.mxu0 0.0
        %446 = vmatpush1.msra.mxu0 0.0
        %447 = vmatprep.subr.mxu0 0.0
        %448 = vmatpush1.msra.mxu0 0.0
        %449 = vmatprep.subr.mxu0 0.0
        %450 = vmatpush1.msra.mxu0 0.0
        %451 = vmatprep.mubr.f32.mxu0 0.0
        %452 = vmatmul.mubr.f32.gmra.mrb[0].mxu0 %v385
        %v453 = vpop.f32.mrb[0].mxu0
        %v454 = vadd.f32 0.0, %v453
        %v455 = vpop.f32.mrb[0].mxu0
        %456 = vdwg.mxu0
        %vm457 = vcmp.eq.f32.partialorder %v454, 0.0
        %v458 = vsel %vm457, 0.0, %v264
        %v459 = vsel %vm346, %v458, 0.0
        %460 = vadd.xlane.f32.xlu0 %v459
        %v461 = vpop.xlane.xlu0 %460
        %v462 = vadd.f32 %v461, %v454
        %464 = vrot.lane.b32.xlu0 %v462, 1
        %v465 = vpop.permute.xlu0 %464
        %v467 = vsel %vm457, -1e+10, %v465
        %v468 = vmax.f32 %v356, %v467
        %v469 = vsub.f32 %v356, %v468
        %v470 = vmul.f32 %v469, 1.442695
        %v471 = vpow.pop %v470
        %v472 = vsub.f32 %v467, %v468
        %v473 = vmul.f32 %v472, 1.442695
        %v474 = vpow.pop %v473
        %v475 = vmul.f32 %v471, %v364
        %v476 = vadd.f32 %v475, %v474
        %478 = vset.pattern.permute.xlu0 33
        %479 = vperm.xlu0 %478, %v471
        %v480 = vpop.permute.xlu0 %479
        %v482 = vmul.f32 %v480, %v377
        %484 = vset.pattern.permute.xlu0 33
        %485 = vperm.xlu0 %484, %v474
        %v486 = vpop.permute.xlu0 %485
        %v488 = vmul.f32 %v486, %v454
        %v489 = vadd.f32 %v482, %v488
        %490 = vset.pattern.permute.xlu0 3
        %491 = vperm.xlu0 %490, %v177
        %v492 = vpop.permute.xlu0 %491
        %vm493 = vcmp.eq.s32.totalorder %v492, %v176
        %v494 = vsel %vm493, 1, 0
        %v495 = vcvt.s32.f32 %v494
        %v497 = vsel %vm184, %v495, 0
        %499 = vmatprep.subr.mxu0 0.0
        %500 = vmatpush1.msra.mxu0 %v166
        %501 = vmatprep.subr.mxu0 0.0
        %502 = vmatpush1.msra.mxu0 %v167
        %503 = vmatprep.subr.mxu0 0.0
        %504 = vmatpush1.msra.mxu0 %v168
        %505 = vmatprep.subr.mxu0 0.0
        %506 = vmatpush1.msra.mxu0 %v169
        %507 = vmatprep.subr.mxu0 0.0
        %508 = vmatpush1.msra.mxu0 %v170
        %509 = vmatprep.subr.mxu0 0.0
        %510 = vmatpush1.msra.mxu0 %v171
        %511 = vmatprep.subr.mxu0 0.0
        %512 = vmatpush1.msra.mxu0 %v172
        %513 = vmatprep.subr.mxu0 0.0
        %514 = vmatpush1.msra.mxu0 %v173
        %515 = vmatprep.subr.mxu0 0.0
        %516 = vmatpush1.msra.mxu0 0.0
        %517 = vmatprep.subr.mxu0 0.0
        %518 = vmatpush1.msra.mxu0 0.0
        %519 = vmatprep.subr.mxu0 0.0
        %520 = vmatpush1.msra.mxu0 0.0
        %521 = vmatprep.subr.mxu0 0.0
        %522 = vmatpush1.msra.mxu0 0.0
        %523 = vmatprep.subr.mxu0 0.0
        %524 = vmatpush1.msra.mxu0 0.0
        %525 = vmatprep.subr.mxu0 0.0
        %526 = vmatpush1.msra.mxu0 0.0
        %527 = vmatprep.subr.mxu0 0.0
        %528 = vmatpush1.msra.mxu0 0.0
        %529 = vmatprep.subr.mxu0 0.0
        %530 = vmatpush1.msra.mxu0 0.0
        %531 = vmatprep.subr.mxu0 0.0
        %532 = vmatpush1.msra.mxu0 0.0
        %533 = vmatprep.subr.mxu0 0.0
        %534 = vmatpush1.msra.mxu0 0.0
        %535 = vmatprep.subr.mxu0 0.0
        %536 = vmatpush1.msra.mxu0 0.0
        %537 = vmatprep.subr.mxu0 0.0
        %538 = vmatpush1.msra.mxu0 0.0
        %539 = vmatprep.subr.mxu0 0.0
        %540 = vmatpush1.msra.mxu0 0.0
        %541 = vmatprep.subr.mxu0 0.0
        %542 = vmatpush1.msra.mxu0 0.0
        %543 = vmatprep.subr.mxu0 0.0
        %544 = vmatpush1.msra.mxu0 0.0
        %545 = vmatprep.subr.mxu0 0.0
        %546 = vmatpush1.msra.mxu0 0.0
        %547 = vmatprep.subr.mxu0 0.0
        %548 = vmatpush1.msra.mxu0 0.0
        %549 = vmatprep.subr.mxu0 0.0
        %550 = vmatpush1.msra.mxu0 0.0
        %551 = vmatprep.subr.mxu0 0.0
        %552 = vmatpush1.msra.mxu0 0.0
        %553 = vmatprep.subr.mxu0 0.0
        %554 = vmatpush1.msra.mxu0 0.0
        %555 = vmatprep.subr.mxu0 0.0
        %556 = vmatpush1.msra.mxu0 0.0
        %557 = vmatprep.subr.mxu0 0.0
        %558 = vmatpush1.msra.mxu0 0.0
        %559 = vmatprep.subr.mxu0 0.0
        %560 = vmatpush1.msra.mxu0 0.0
        %561 = vmatprep.subr.mxu0 0.0
        %562 = vmatpush1.msra.mxu0 0.0
        %563 = vmatprep.mubr.f32.mxu0 0.0
        %564 = vmatmul.mubr.f32.gmra.mrb[0].mxu0 %v497
        %v565 = vpop.f32.mrb[0].mxu0
        %v566 = vadd.f32 0.0, %v565
        %v567 = vpop.f32.mrb[0].mxu0
        %568 = vdwg.mxu0
        %vm569 = vcmp.eq.f32.partialorder %v566, 0.0
        %v570 = vsel %vm569, 0.0, %v264
        %v571 = vsel %vm346, %v570, 0.0
        %572 = vadd.xlane.f32.xlu0 %v571
        %v573 = vpop.xlane.xlu0 %572
        %v574 = vadd.f32 %v573, %v566
        %576 = vrot.lane.b32.xlu0 %v574, 1
        %v577 = vpop.permute.xlu0 %576
        %v579 = vsel %vm569, -1e+10, %v577
        %v580 = vmax.f32 %v468, %v579
        %v581 = vsub.f32 %v468, %v580
        %v582 = vmul.f32 %v581, 1.442695
        %v583 = vpow.pop %v582
        %v584 = vsub.f32 %v579, %v580
        %v585 = vmul.f32 %v584, 1.442695
        %v586 = vpow.pop %v585
        %v587 = vmul.f32 %v583, %v476
        %v588 = vadd.f32 %v587, %v586
        %590 = vset.pattern.permute.xlu0 33
        %591 = vperm.xlu0 %590, %v583
        %v592 = vpop.permute.xlu0 %591
        %v594 = vmul.f32 %v592, %v489
        %596 = vset.pattern.permute.xlu0 33
        %597 = vperm.xlu0 %596, %v586
        %v598 = vpop.permute.xlu0 %597
        %v600 = vmul.f32 %v598, %v566
        %v601 = vadd.f32 %v594, %v600
        %602 = vset.pattern.permute.xlu0 4
        %603 = vperm.xlu0 %602, %v177
        %v604 = vpop.permute.xlu0 %603
        %vm605 = vcmp.eq.s32.totalorder %v604, %v176
        %v606 = vsel %vm605, 1, 0
        %v607 = vcvt.s32.f32 %v606
        %v609 = vsel %vm184, %v607, 0
        %611 = vmatprep.subr.mxu0 0.0
        %612 = vmatpush1.msra.mxu0 %v166
        %613 = vmatprep.subr.mxu0 0.0
        %614 = vmatpush1.msra.mxu0 %v167
        %615 = vmatprep.subr.mxu0 0.0
        %616 = vmatpush1.msra.mxu0 %v168
        %617 = vmatprep.subr.mxu0 0.0
        %618 = vmatpush1.msra.mxu0 %v169
        %619 = vmatprep.subr.mxu0 0.0
        %620 = vmatpush1.msra.mxu0 %v170
        %621 = vmatprep.subr.mxu0 0.0
        %622 = vmatpush1.msra.mxu0 %v171
        %623 = vmatprep.subr.mxu0 0.0
        %624 = vmatpush1.msra.mxu0 %v172
        %625 = vmatprep.subr.mxu0 0.0
        %626 = vmatpush1.msra.mxu0 %v173
        %627 = vmatprep.subr.mxu0 0.0
        %628 = vmatpush1.msra.mxu0 0.0
        %629 = vmatprep.subr.mxu0 0.0
        %630 = vmatpush1.msra.mxu0 0.0
        %631 = vmatprep.subr.mxu0 0.0
        %632 = vmatpush1.msra.mxu0 0.0
        %633 = vmatprep.subr.mxu0 0.0
        %634 = vmatpush1.msra.mxu0 0.0
        %635 = vmatprep.subr.mxu0 0.0
        %636 = vmatpush1.msra.mxu0 0.0
        %637 = vmatprep.subr.mxu0 0.0
        %638 = vmatpush1.msra.mxu0 0.0
        %639 = vmatprep.subr.mxu0 0.0
        %640 = vmatpush1.msra.mxu0 0.0
        %641 = vmatprep.subr.mxu0 0.0
        %642 = vmatpush1.msra.mxu0 0.0
        %643 = vmatprep.subr.mxu0 0.0
        %644 = vmatpush1.msra.mxu0 0.0
        %645 = vmatprep.subr.mxu0 0.0
        %646 = vmatpush1.msra.mxu0 0.0
        %647 = vmatprep.subr.mxu0 0.0
        %648 = vmatpush1.msra.mxu0 0.0
        %649 = vmatprep.subr.mxu0 0.0
        %650 = vmatpush1.msra.mxu0 0.0
        %651 = vmatprep.subr.mxu0 0.0
        %652 = vmatpush1.msra.mxu0 0.0
        %653 = vmatprep.subr.mxu0 0.0
        %654 = vmatpush1.msra.mxu0 0.0
        %655 = vmatprep.subr.mxu0 0.0
        %656 = vmatpush1.msra.mxu0 0.0
        %657 = vmatprep.subr.mxu0 0.0
        %658 = vmatpush1.msra.mxu0 0.0
        %659 = vmatprep.subr.mxu0 0.0
        %660 = vmatpush1.msra.mxu0 0.0
        %661 = vmatprep.subr.mxu0 0.0
        %662 = vmatpush1.msra.mxu0 0.0
        %663 = vmatprep.subr.mxu0 0.0
        %664 = vmatpush1.msra.mxu0 0.0
        %665 = vmatprep.subr.mxu0 0.0
        %666 = vmatpush1.msra.mxu0 0.0
        %667 = vmatprep.subr.mxu0 0.0
        %668 = vmatpush1.msra.mxu0 0.0
        %669 = vmatprep.subr.mxu0 0.0
        %670 = vmatpush1.msra.mxu0 0.0
        %671 = vmatprep.subr.mxu0 0.0
        %672 = vmatpush1.msra.mxu0 0.0
        %673 = vmatprep.subr.mxu0 0.0
        %674 = vmatpush1.msra.mxu0 0.0
        %675 = vmatprep.mubr.f32.mxu0 0.0
        %676 = vmatmul.mubr.f32.gmra.mrb[0].mxu0 %v609
        %v677 = vpop.f32.mrb[0].mxu0
        %v678 = vadd.f32 0.0, %v677
        %v679 = vpop.f32.mrb[0].mxu0
        %680 = vdwg.mxu0
        %vm681 = vcmp.eq.f32.partialorder %v678, 0.0
        %v682 = vsel %vm681, 0.0, %v264
        %v683 = vsel %vm346, %v682, 0.0
        %684 = vadd.xlane.f32.xlu0 %v683
        %v685 = vpop.xlane.xlu0 %684
        %v686 = vadd.f32 %v685, %v678
        %688 = vrot.lane.b32.xlu0 %v686, 1
        %v689 = vpop.permute.xlu0 %688
        %v691 = vsel %vm681, -1e+10, %v689
        %v692 = vmax.f32 %v580, %v691
        %v693 = vsub.f32 %v580, %v692
        %v694 = vmul.f32 %v693, 1.442695
        %v695 = vpow.pop %v694
        %v696 = vsub.f32 %v691, %v692
        %v697 = vmul.f32 %v696, 1.442695
        %v698 = vpow.pop %v697
        %v699 = vmul.f32 %v695, %v588
        %v700 = vadd.f32 %v699, %v698
        %702 = vset.pattern.permute.xlu0 33
        %703 = vperm.xlu0 %702, %v695
        %v704 = vpop.permute.xlu0 %703
        %v706 = vmul.f32 %v704, %v601
        %708 = vset.pattern.permute.xlu0 33
        %709 = vperm.xlu0 %708, %v698
        %v710 = vpop.permute.xlu0 %709
        %v712 = vmul.f32 %v710, %v678
        %v713 = vadd.f32 %v706, %v712
        %714 = vset.pattern.permute.xlu0 5
        %715 = vperm.xlu0 %714, %v177
        %v716 = vpop.permute.xlu0 %715
        %vm717 = vcmp.eq.s32.totalorder %v716, %v176
        %v718 = vsel %vm717, 1, 0
        %v719 = vcvt.s32.f32 %v718
        %v721 = vsel %vm184, %v719, 0
        %723 = vmatprep.subr.mxu0 0.0
        %724 = vmatpush1.msra.mxu0 %v166
        %725 = vmatprep.subr.mxu0 0.0
        %726 = vmatpush1.msra.mxu0 %v167
        %727 = vmatprep.subr.mxu0 0.0
        %728 = vmatpush1.msra.mxu0 %v168
        %729 = vmatprep.subr.mxu0 0.0
        %730 = vmatpush1.msra.mxu0 %v169
        %731 = vmatprep.subr.mxu0 0.0
        %732 = vmatpush1.msra.mxu0 %v170
        %733 = vmatprep.subr.mxu0 0.0
        %734 = vmatpush1.msra.mxu0 %v171
        %735 = vmatprep.subr.mxu0 0.0
        %736 = vmatpush1.msra.mxu0 %v172
        %737 = vmatprep.subr.mxu0 0.0
        %738 = vmatpush1.msra.mxu0 %v173
        %739 = vmatprep.subr.mxu0 0.0
        %740 = vmatpush1.msra.mxu0 0.0
        %741 = vmatprep.subr.mxu0 0.0
        %742 = vmatpush1.msra.mxu0 0.0
        %743 = vmatprep.subr.mxu0 0.0
        %744 = vmatpush1.msra.mxu0 0.0
        %745 = vmatprep.subr.mxu0 0.0
        %746 = vmatpush1.msra.mxu0 0.0
        %747 = vmatprep.subr.mxu0 0.0
        %748 = vmatpush1.msra.mxu0 0.0
        %749 = vmatprep.subr.mxu0 0.0
        %750 = vmatpush1.msra.mxu0 0.0
        %751 = vmatprep.subr.mxu0 0.0
        %752 = vmatpush1.msra.mxu0 0.0
        %753 = vmatprep.subr.mxu0 0.0
        %754 = vmatpush1.msra.mxu0 0.0
        %755 = vmatprep.subr.mxu0 0.0
        %756 = vmatpush1.msra.mxu0 0.0
        %757 = vmatprep.subr.mxu0 0.0
        %758 = vmatpush1.msra.mxu0 0.0
        %759 = vmatprep.subr.mxu0 0.0
        %760 = vmatpush1.msra.mxu0 0.0
        %761 = vmatprep.subr.mxu0 0.0
        %762 = vmatpush1.msra.mxu0 0.0
        %763 = vmatprep.subr.mxu0 0.0
        %764 = vmatpush1.msra.mxu0 0.0
        %765 = vmatprep.subr.mxu0 0.0
        %766 = vmatpush1.msra.mxu0 0.0
        %767 = vmatprep.subr.mxu0 0.0
        %768 = vmatpush1.msra.mxu0 0.0
        %769 = vmatprep.subr.mxu0 0.0
        %770 = vmatpush1.msra.mxu0 0.0
        %771 = vmatprep.subr.mxu0 0.0
        %772 = vmatpush1.msra.mxu0 0.0
        %773 = vmatprep.subr.mxu0 0.0
        %774 = vmatpush1.msra.mxu0 0.0
        %775 = vmatprep.subr.mxu0 0.0
        %776 = vmatpush1.msra.mxu0 0.0
        %777 = vmatprep.subr.mxu0 0.0
        %778 = vmatpush1.msra.mxu0 0.0
        %779 = vmatprep.subr.mxu0 0.0
        %780 = vmatpush1.msra.mxu0 0.0
        %781 = vmatprep.subr.mxu0 0.0
        %782 = vmatpush1.msra.mxu0 0.0
        %783 = vmatprep.subr.mxu0 0.0
        %784 = vmatpush1.msra.mxu0 0.0
        %785 = vmatprep.subr.mxu0 0.0
        %786 = vmatpush1.msra.mxu0 0.0
        %787 = vmatprep.mubr.f32.mxu0 0.0
        %788 = vmatmul.mubr.f32.gmra.mrb[0].mxu0 %v721
        %v789 = vpop.f32.mrb[0].mxu0
        %v790 = vadd.f32 0.0, %v789
        %v791 = vpop.f32.mrb[0].mxu0
        %792 = vdwg.mxu0
        %vm793 = vcmp.eq.f32.partialorder %v790, 0.0
        %v794 = vsel %vm793, 0.0, %v264
        %v795 = vsel %vm346, %v794, 0.0
        %796 = vadd.xlane.f32.xlu0 %v795
        %v797 = vpop.xlane.xlu0 %796
        %v798 = vadd.f32 %v797, %v790
        %800 = vrot.lane.b32.xlu0 %v798, 1
        %v801 = vpop.permute.xlu0 %800
        %v803 = vsel %vm793, -1e+10, %v801
        %v804 = vmax.f32 %v692, %v803
        %v805 = vsub.f32 %v692, %v804
        %v806 = vmul.f32 %v805, 1.442695
        %v807 = vpow.pop %v806
        %v808 = vsub.f32 %v803, %v804
        %v809 = vmul.f32 %v808, 1.442695
        %v810 = vpow.pop %v809
        %v811 = vmul.f32 %v807, %v700
        %v812 = vadd.f32 %v811, %v810
        %814 = vset.pattern.permute.xlu0 33
        %815 = vperm.xlu0 %814, %v807
        %v816 = vpop.permute.xlu0 %815
        %v818 = vmul.f32 %v816, %v713
        %820 = vset.pattern.permute.xlu0 33
        %821 = vperm.xlu0 %820, %v810
        %v822 = vpop.permute.xlu0 %821
        %v824 = vmul.f32 %v822, %v790
        %v825 = vadd.f32 %v818, %v824
        %826 = vset.pattern.permute.xlu0 6
        %827 = vperm.xlu0 %826, %v177
        %v828 = vpop.permute.xlu0 %827
        %vm829 = vcmp.eq.s32.totalorder %v828, %v176
        %v830 = vsel %vm829, 1, 0
        %v831 = vcvt.s32.f32 %v830
        %v833 = vsel %vm184, %v831, 0
        %835 = vmatprep.subr.mxu0 0.0
        %836 = vmatpush1.msra.mxu0 %v166
        %837 = vmatprep.subr.mxu0 0.0
        %838 = vmatpush1.msra.mxu0 %v167
        %839 = vmatprep.subr.mxu0 0.0
        %840 = vmatpush1.msra.mxu0 %v168
        %841 = vmatprep.subr.mxu0 0.0
        %842 = vmatpush1.msra.mxu0 %v169
        %843 = vmatprep.subr.mxu0 0.0
        %844 = vmatpush1.msra.mxu0 %v170
        %845 = vmatprep.subr.mxu0 0.0
        %846 = vmatpush1.msra.mxu0 %v171
        %847 = vmatprep.subr.mxu0 0.0
        %848 = vmatpush1.msra.mxu0 %v172
        %849 = vmatprep.subr.mxu0 0.0
        %850 = vmatpush1.msra.mxu0 %v173
        %851 = vmatprep.subr.mxu0 0.0
        %852 = vmatpush1.msra.mxu0 0.0
        %853 = vmatprep.subr.mxu0 0.0
        %854 = vmatpush1.msra.mxu0 0.0
        %855 = vmatprep.subr.mxu0 0.0
        %856 = vmatpush1.msra.mxu0 0.0
        %857 = vmatprep.subr.mxu0 0.0
        %858 = vmatpush1.msra.mxu0 0.0
        %859 = vmatprep.subr.mxu0 0.0
        %860 = vmatpush1.msra.mxu0 0.0
        %861 = vmatprep.subr.mxu0 0.0
        %862 = vmatpush1.msra.mxu0 0.0
        %863 = vmatprep.subr.mxu0 0.0
        %864 = vmatpush1.msra.mxu0 0.0
        %865 = vmatprep.subr.mxu0 0.0
        %866 = vmatpush1.msra.mxu0 0.0
        %867 = vmatprep.subr.mxu0 0.0
        %868 = vmatpush1.msra.mxu0 0.0
        %869 = vmatprep.subr.mxu0 0.0
        %870 = vmatpush1.msra.mxu0 0.0
        %871 = vmatprep.subr.mxu0 0.0
        %872 = vmatpush1.msra.mxu0 0.0
        %873 = vmatprep.subr.mxu0 0.0
        %874 = vmatpush1.msra.mxu0 0.0
        %875 = vmatprep.subr.mxu0 0.0
        %876 = vmatpush1.msra.mxu0 0.0
        %877 = vmatprep.subr.mxu0 0.0
        %878 = vmatpush1.msra.mxu0 0.0
        %879 = vmatprep.subr.mxu0 0.0
        %880 = vmatpush1.msra.mxu0 0.0
        %881 = vmatprep.subr.mxu0 0.0
        %882 = vmatpush1.msra.mxu0 0.0
        %883 = vmatprep.subr.mxu0 0.0
        %884 = vmatpush1.msra.mxu0 0.0
        %885 = vmatprep.subr.mxu0 0.0
        %886 = vmatpush1.msra.mxu0 0.0
        %887 = vmatprep.subr.mxu0 0.0
        %888 = vmatpush1.msra.mxu0 0.0
        %889 = vmatprep.subr.mxu0 0.0
        %890 = vmatpush1.msra.mxu0 0.0
        %891 = vmatprep.subr.mxu0 0.0
        %892 = vmatpush1.msra.mxu0 0.0
        %893 = vmatprep.subr.mxu0 0.0
        %894 = vmatpush1.msra.mxu0 0.0
        %895 = vmatprep.subr.mxu0 0.0
        %896 = vmatpush1.msra.mxu0 0.0
        %897 = vmatprep.subr.mxu0 0.0
        %898 = vmatpush1.msra.mxu0 0.0
        %899 = vmatprep.mubr.f32.mxu0 0.0
        %900 = vmatmul.mubr.f32.gmra.mrb[0].mxu0 %v833
        %v901 = vpop.f32.mrb[0].mxu0
        %v902 = vadd.f32 0.0, %v901
        %v903 = vpop.f32.mrb[0].mxu0
        %904 = vdwg.mxu0
        %vm905 = vcmp.eq.f32.partialorder %v902, 0.0
        %v906 = vsel %vm905, 0.0, %v264
        %v907 = vsel %vm346, %v906, 0.0
        %908 = vadd.xlane.f32.xlu0 %v907
        %v909 = vpop.xlane.xlu0 %908
        %v910 = vadd.f32 %v909, %v902
        %912 = vrot.lane.b32.xlu0 %v910, 1
        %v913 = vpop.permute.xlu0 %912
        %v915 = vsel %vm905, -1e+10, %v913
        %v916 = vmax.f32 %v804, %v915
        %v917 = vsub.f32 %v804, %v916
        %v918 = vmul.f32 %v917, 1.442695
        %v919 = vpow.pop %v918
        %v920 = vsub.f32 %v915, %v916
        %v921 = vmul.f32 %v920, 1.442695
        %v922 = vpow.pop %v921
        %v923 = vmul.f32 %v919, %v812
        %v924 = vadd.f32 %v923, %v922
        %926 = vset.pattern.permute.xlu0 33
        %927 = vperm.xlu0 %926, %v919
        %v928 = vpop.permute.xlu0 %927
        %v930 = vmul.f32 %v928, %v825
        %932 = vset.pattern.permute.xlu0 33
        %933 = vperm.xlu0 %932, %v922
        %v934 = vpop.permute.xlu0 %933
        %v936 = vmul.f32 %v934, %v902
        %v937 = vadd.f32 %v930, %v936
        %v938 = vrcp.pop %v924
        %v939 = vmul.f32 %v924, %v938
        %v940 = vsub.f32 2.0, %v939
        %v941 = vmul.f32 %v938, %v940
        %943 = vset.pattern.permute.xlu0 33
        %944 = vperm.xlu0 %943, %v941
        %v945 = vpop.permute.xlu0 %944
        %v947 = vmul.f32 %v937, %v945
        %948 = vst.msk [vmem:[%s161] sm:$0xff] %vm346, %v947
        %s949 = sand.u32 %s93, 1
        %s950 = scalar_lea.sflag [#allocation3], %s949
        %s951 = sand.u32 %s93, 1
        %s952 = smul.addr %s951, 8
        %s953 = scalar_lea.vmem [#allocation2], %s952
        // Predicated region
        $region33: #{tpu_custom_call.1} parent=31 // pred_check
          %p954 = pneg %p103
        $region34: #{tpu_custom_call.1} parent=31 // pred_check_branch
          %956 = sbr.rel (%p954) target = $region36
        $region35: #{tpu_custom_call.1} parent=31 // pred_region
          %s958 = ssub.s32 128, 128
          %959 = vsyncadd %s950, %s958
          %s960 = smul.addr %s17, 128
          %s961 = scalar_lea.hbm %s3, %s960
          %s963 = sshll.u32 %s953, 4
          %s964 = int_to_ptr.vmem [resolvable:$true] %s963
          %966 = dma.vmem_to_hbm [thread:$0]  %s964, 128, %s961, %s950
        $region36: #{tpu_custom_call.1} parent=31 // pred_fallthru
          _
      $region32: #{tpu_custom_call.1} parent=5 // pred_fallthru
        _
      %p967 = scmp.le.s32.totalorder 2, %s12
      // Predicated region
      $region37: #{tpu_custom_call.1} parent=5 // pred_check
        %p968 = pneg %p967
      $region38: #{tpu_custom_call.1} parent=5 // pred_check_branch
        %970 = sbr.rel (%p968) target = $region40
      $region39: #{tpu_custom_call.1} parent=5 // pred_region
        %s971 = ssub.s32 %s12, 2
        // Predicated region
        $region41: #{tpu_custom_call.1} parent=39 // pred_check
          %p972 = pneg %p109
        $region42: #{tpu_custom_call.1} parent=39 // pred_check_branch
          %974 = sbr.rel (%p972) target = $region44
        $region43: #{tpu_custom_call.1} parent=39 // pred_region
          %s975 = sand.u32 %s94, 1
          %s976 = scalar_lea.sflag [#allocation3], %s975
          %s977 = sand.u32 %s94, 1
          %s978 = smul.addr %s977, 8
          %s979 = scalar_lea.vmem [#allocation2], %s978
          %980 = dma.done %s976, 128
        $region44: #{tpu_custom_call.1} parent=39 // pred_fallthru
          _
      $region40: #{tpu_custom_call.1} parent=5 // pred_fallthru
        _
    $region6: #{tpu_custom_call.1} parent=1 // loop_footer
      %s16 = sadd.s32 1, %s12
    $region7: #{tpu_custom_call.1} parent=1 // loop_footer_branch
      %11 = sbr.rel target = $region3
    $region8: #{tpu_custom_call.1} parent=1 // loop_exit
      _
    %981 = vsyncpa [#allocation3], 1
    %s982 = scalar_lea.sflag [#allocation3], 1
    %983 = vsyncpa %s982, 1

</llo_original>
